<compile_context>
chip_gen: v7x
topology: tpu7x:2x2x1
jax: 0.10.0
libtpu: 0.0.40
codegen_flags: <defaults>
</compile_context>

<pallas_src>
import math
import jax
import jax.numpy as jnp
from jax.experimental import pallas as pl
from jax.experimental.pallas import tpu as pltpu

MAX_BOARD_SIZE = 9.0
_TB_TARGET = 1024   # batch tile (lane) width; multiple of 128


def _round_up(x, m):
    return ((x + m - 1) // m) * m


def _naked_single_kernel(x_ref,            # [3, TB]  packed (row; col; board_size)
                         w1_ref, b1_ref,   # [128, 3] f32, [128, 1] f32
                         w2_ref, b2_ref,   # [64, 128] bf16, [64, 1] f32
                         w3_ref, b3_ref,   # [32, 64]  bf16, [32, 1] f32
                         w4_ref, b4_ref,   # [32, 1]  f32,  [1, 1]  f32
                         out_ref):         # [1, TB]  f32
    # feature normalization (VPU + one EUP reciprocal)
    size = x_ref[2:3, :]                                  # [1, TB]
    inv = pl.reciprocal(size - 1.0, approx=True)          # EUP slot, ~free
    row_n = x_ref[0:1, :] * inv
    col_n = x_ref[1:2, :] * inv
    size_n = size * (1.0 / MAX_BOARD_SIZE)

    # Linear(3, 128): W1 @ feats + b1 as rank-1 broadcast sums -> [128, TB]
    h = (w1_ref[:, 0:1] * row_n
         + w1_ref[:, 1:2] * col_n
         + w1_ref[:, 2:3] * size_n
         + b1_ref[...])
    h = jnp.maximum(h, 0.0)

    # Linear(128, 64) + ReLU   (bf16 MXU operands, f32 accumulate)
    h = jnp.dot(w2_ref[...], h.astype(jnp.bfloat16),
                preferred_element_type=jnp.float32) + b2_ref[...]
    h = jnp.maximum(h, 0.0)

    # Linear(64, 32) + ReLU
    h = jnp.dot(w3_ref[...], h.astype(jnp.bfloat16),
                preferred_element_type=jnp.float32) + b3_ref[...]
    h = jnp.maximum(h, 0.0)

    # Linear(32, 1) + Sigmoid: VPU multiply + sublane reduce (skip 1-wide MXU op)
    logit = jnp.sum(h * w4_ref[...], axis=0, keepdims=True) + b4_ref[...]  # [1, TB]
    out_ref[...] = jax.nn.sigmoid(logit)


def naked_single_forward(row, col, board, candidates, board_size, params):
    """Pallas forward of NakedSingleModel. Returns per-element probabilities."""
    del board, candidates  # unused by the network (matches the torch module)
    w1, b1, w2, b2, w3, b3, w4, b4 = params   # torch layout: W[out, in], b[out]
    B = row.shape[0]

    # batch tiling: lane-dense tiles of TB rows, batch padded to a multiple of TB
    TB = _round_up(B, 128) if B <= _TB_TARGET else _TB_TARGET
    B_pad = _round_up(B, TB)
    pad = B_pad - B

    row_f = jnp.pad(row.astype(jnp.float32), (0, pad))
    col_f = jnp.pad(col.astype(jnp.float32), (0, pad))
    size_f = jnp.pad(board_size.astype(jnp.float32), (0, pad),
                     constant_values=MAX_BOARD_SIZE)        # pad never divides by 0
    feats = jnp.stack([row_f, col_f, size_f], axis=0)       # [3, B_pad], lane-dense

    # weight prep (hoisted / constant-folded under jit)
    w1_f = w1.astype(jnp.float32)                           # [128, 3]
    b1_c = b1.astype(jnp.float32).reshape(-1, 1)            # [128, 1]
    w2_bf = w2.astype(jnp.bfloat16)                         # [64, 128]
    b2_c = b2.astype(jnp.float32).reshape(-1, 1)            # [64, 1]
    w3_bf = w3.astype(jnp.bfloat16)                         # [32, 64]
    b3_c = b3.astype(jnp.float32).reshape(-1, 1)            # [32, 1]
    w4_c = w4.astype(jnp.float32).reshape(-1, 1)            # [32, 1]
    b4_c = b4.astype(jnp.float32).reshape(1, 1)             # [1, 1]

    def pinned(shape):
        return pl.BlockSpec(shape, lambda i, _s=shape: (0,) * len(_s))

    out = pl.pallas_call(
        _naked_single_kernel,
        out_shape=jax.ShapeDtypeStruct((1, B_pad), jnp.float32),
        grid=(B_pad // TB,),
        in_specs=[
            pl.BlockSpec((3, TB), lambda i: (0, i)),
            pinned(w1_f.shape), pinned(b1_c.shape),
            pinned(w2_bf.shape), pinned(b2_c.shape),
            pinned(w3_bf.shape), pinned(b3_c.shape),
            pinned(w4_c.shape), pinned(b4_c.shape),
        ],
        out_specs=pl.BlockSpec((1, TB), lambda i: (0, i)),
        compiler_params=pltpu.CompilerParams(
            dimension_semantics=("parallel",)),
    )(feats, w1_f, b1_c, w2_bf, b2_c, w3_bf, b3_c, w4_c, b4_c)

    return jnp.squeeze(out[0, :B])   # torch .squeeze()


def init_params(key):
    """Deterministic init matching nn.Linear shapes (torch layout W[out, in])."""
    dims = [(3, 128), (128, 64), (64, 32), (32, 1)]
    params = []
    for i, (fan_in, fan_out) in enumerate(dims):
        kw, kb, key = jax.random.split(jax.random.fold_in(key, i), 3)
        bound = 1.0 / math.sqrt(fan_in)
        w = jax.random.uniform(kw, (fan_out, fan_in), jnp.float32, -bound, bound)
        b = jax.random.uniform(kb, (fan_out,), jnp.float32, -bound, bound)
        params += [w, b]
    return tuple(params)


def _reference(row, col, board_size, params):
    """Pure-JAX f32 reference of NakedSingleModel.forward."""
    w1, b1, w2, b2, w3, b3, w4, b4 = params
    denom = board_size.astype(jnp.float32) - 1.0
    feats = jnp.stack(
        [row.astype(jnp.float32) / denom,
         col.astype(jnp.float32) / denom,
         board_size.astype(jnp.float32) / MAX_BOARD_SIZE], axis=1)   # [B, 3]
    h = jax.nn.relu(feats @ w1.T + b1)
    h = jax.nn.relu(h @ w2.T + b2)
    h = jax.nn.relu(h @ w3.T + b3)
    return jnp.squeeze(jax.nn.sigmoid(h @ w4.T + b4))


if __name__ == "__main__":
    key = jax.random.PRNGKey(0)
    params = init_params(key)

    B = 8
    k1, k2 = jax.random.split(jax.random.fold_in(key, 100))
    row = jax.random.randint(k1, (B,), 0, 9).astype(jnp.int32)        # rows 0..8
    col = jax.random.randint(k2, (B,), 0, 9).astype(jnp.int32)        # cols 0..8
    board = jnp.zeros((B, 81), dtype=jnp.float32)                     # unused by forward
    candidates = jnp.zeros((B, 9), dtype=jnp.float32)                 # unused by forward
    board_size = jnp.full((B,), 9, dtype=jnp.int32)

    out = jax.block_until_ready(
        naked_single_forward(row, col, board, candidates, board_size, params))
    ref = _reference(row, col, board_size, params)

    assert out.shape == (B,)
    # bf16 MXU operands (f32 accumulate) -> relaxed tolerance vs. the f32 reference
    assert jnp.allclose(out, ref, atol=2e-2, rtol=1e-2)
    print("KERNEL_OK")
</pallas_src>

<mosaic_0001>
module attributes {stable_mosaic.version = 11 : i64} {
  func.func @_naked_single_kernel(%arg0: i32, %arg1: memref<3x128xf32, #tpu.memory_space<vmem>>, %arg2: memref<128x3xf32, #tpu.memory_space<vmem>>, %arg3: memref<128x1xf32, #tpu.memory_space<vmem>>, %arg4: memref<64x128xbf16, #tpu.memory_space<vmem>>, %arg5: memref<64x1xf32, #tpu.memory_space<vmem>>, %arg6: memref<32x64xbf16, #tpu.memory_space<vmem>>, %arg7: memref<32x1xf32, #tpu.memory_space<vmem>>, %arg8: memref<32x1xf32, #tpu.memory_space<vmem>>, %arg9: memref<1x1xf32, #tpu.memory_space<vmem>>, %arg10: memref<1x128xf32, #tpu.memory_space<vmem>>) attributes {dimension_semantics = [#tpu.dimension_semantics<parallel>], iteration_bounds = array<i64: 1>, scalar_prefetch = 0 : i64, scratch_operands = 0 : i64, tpu.core_type = #tpu.core_type<tc>, window_params = [{transform_indices = @transform_0, window_bounds = array<i64: 3, 128>}, {pipeline_mode = #tpu.pipeline_mode<synchronous>, transform_indices = @transform_1, window_bounds = array<i64: 128, 3>}, {pipeline_mode = #tpu.pipeline_mode<synchronous>, transform_indices = @transform_2, window_bounds = array<i64: 128, 1>}, {pipeline_mode = #tpu.pipeline_mode<synchronous>, transform_indices = @transform_3, window_bounds = array<i64: 64, 128>}, {pipeline_mode = #tpu.pipeline_mode<synchronous>, transform_indices = @transform_4, window_bounds = array<i64: 64, 1>}, {pipeline_mode = #tpu.pipeline_mode<synchronous>, transform_indices = @transform_5, window_bounds = array<i64: 32, 64>}, {pipeline_mode = #tpu.pipeline_mode<synchronous>, transform_indices = @transform_6, window_bounds = array<i64: 32, 1>}, {pipeline_mode = #tpu.pipeline_mode<synchronous>, transform_indices = @transform_7, window_bounds = array<i64: 32, 1>}, {pipeline_mode = #tpu.pipeline_mode<synchronous>, transform_indices = @transform_8, window_bounds = array<i64: 1, 1>}, {transform_indices = @transform_9, window_bounds = array<i64: 1, 128>}]} {
    %c2 = arith.constant 2 : index
    %c0 = arith.constant 0 : index
    %0 = vector.load %arg1[%c2, %c0] : memref<3x128xf32, #tpu.memory_space<vmem>>, vector<1x128xf32>
    %cst = arith.constant 1.000000e+00 : f32
    %1 = vector.broadcast %cst : f32 to vector<1x128xf32>
    %2 = arith.subf %0, %1 : vector<1x128xf32>
    %3 = tpu.reciprocal %2 {approx = true} : vector<1x128xf32> -> vector<1x128xf32>
    %c0_0 = arith.constant 0 : index
    %c0_1 = arith.constant 0 : index
    %4 = vector.load %arg1[%c0_0, %c0_1] : memref<3x128xf32, #tpu.memory_space<vmem>>, vector<1x128xf32>
    %5 = arith.mulf %4, %3 : vector<1x128xf32>
    %c1 = arith.constant 1 : index
    %c0_2 = arith.constant 0 : index
    %6 = vector.load %arg1[%c1, %c0_2] : memref<3x128xf32, #tpu.memory_space<vmem>>, vector<1x128xf32>
    %7 = arith.mulf %6, %3 : vector<1x128xf32>
    %cst_3 = arith.constant 0.111111112 : f32
    %8 = vector.broadcast %cst_3 : f32 to vector<1x128xf32>
    %9 = arith.mulf %0, %8 : vector<1x128xf32>
    %c0_4 = arith.constant 0 : index
    %c0_5 = arith.constant 0 : index
    %10 = vector.load %arg2[%c0_4, %c0_5] : memref<128x3xf32, #tpu.memory_space<vmem>>, vector<128x1xf32>
    %11 = vector.broadcast %10 : vector<128x1xf32> to vector<128x128xf32>
    %12 = vector.broadcast %5 : vector<1x128xf32> to vector<128x128xf32>
    %13 = arith.mulf %11, %12 : vector<128x128xf32>
    %c0_6 = arith.constant 0 : index
    %c1_7 = arith.constant 1 : index
    %14 = vector.load %arg2[%c0_6, %c1_7] : memref<128x3xf32, #tpu.memory_space<vmem>>, vector<128x1xf32>
    %15 = vector.broadcast %14 : vector<128x1xf32> to vector<128x128xf32>
    %16 = vector.broadcast %7 : vector<1x128xf32> to vector<128x128xf32>
    %17 = arith.mulf %15, %16 : vector<128x128xf32>
    %18 = arith.addf %13, %17 : vector<128x128xf32>
    %c0_8 = arith.constant 0 : index
    %c2_9 = arith.constant 2 : index
    %19 = vector.load %arg2[%c0_8, %c2_9] : memref<128x3xf32, #tpu.memory_space<vmem>>, vector<128x1xf32>
    %20 = vector.broadcast %19 : vector<128x1xf32> to vector<128x128xf32>
    %21 = vector.broadcast %9 : vector<1x128xf32> to vector<128x128xf32>
    %22 = arith.mulf %20, %21 : vector<128x128xf32>
    %23 = arith.addf %18, %22 : vector<128x128xf32>
    %c0_10 = arith.constant 0 : index
    %c0_11 = arith.constant 0 : index
    %24 = vector.load %arg3[%c0_10, %c0_11] : memref<128x1xf32, #tpu.memory_space<vmem>>, vector<128x1xf32>
    %25 = vector.broadcast %24 : vector<128x1xf32> to vector<128x128xf32>
    %26 = arith.addf %23, %25 : vector<128x128xf32>
    %cst_12 = arith.constant 0.000000e+00 : f32
    %27 = vector.broadcast %cst_12 : f32 to vector<128x128xf32>
    %28 = arith.maximumf %26, %27 : vector<128x128xf32>
    %c0_13 = arith.constant 0 : index
    %c0_14 = arith.constant 0 : index
    %29 = vector.load %arg4[%c0_13, %c0_14] : memref<64x128xbf16, #tpu.memory_space<vmem>>, vector<64x128xbf16>
    %30 = arith.truncf %28 : vector<128x128xf32> to vector<128x128xbf16>
    %cst_15 = arith.constant dense<0.000000e+00> : vector<64x128xf32>
    %31 = tpu.matmul %29, %30, %cst_15 {dimension_numbers = #tpu.dot_dimension_numbers<[1], [0], [0], [1], [0, 0, 1, 1], [], []>} : vector<64x128xbf16>, vector<128x128xbf16>, vector<64x128xf32> -> vector<64x128xf32>
    %c0_16 = arith.constant 0 : index
    %c0_17 = arith.constant 0 : index
    %32 = vector.load %arg5[%c0_16, %c0_17] : memref<64x1xf32, #tpu.memory_space<vmem>>, vector<64x1xf32>
    %33 = vector.broadcast %32 : vector<64x1xf32> to vector<64x128xf32>
    %34 = arith.addf %31, %33 : vector<64x128xf32>
    %cst_18 = arith.constant 0.000000e+00 : f32
    %35 = vector.broadcast %cst_18 : f32 to vector<64x128xf32>
    %36 = arith.maximumf %34, %35 : vector<64x128xf32>
    %c0_19 = arith.constant 0 : index
    %c0_20 = arith.constant 0 : index
    %37 = vector.load %arg6[%c0_19, %c0_20] : memref<32x64xbf16, #tpu.memory_space<vmem>>, vector<32x64xbf16>
    %38 = arith.truncf %36 : vector<64x128xf32> to vector<64x128xbf16>
    %cst_21 = arith.constant dense<0.000000e+00> : vector<32x128xf32>
    %39 = tpu.matmul %37, %38, %cst_21 {dimension_numbers = #tpu.dot_dimension_numbers<[1], [0], [0], [1], [0, 0, 1, 1], [], []>} : vector<32x64xbf16>, vector<64x128xbf16>, vector<32x128xf32> -> vector<32x128xf32>
    %c0_22 = arith.constant 0 : index
    %c0_23 = arith.constant 0 : index
    %40 = vector.load %arg7[%c0_22, %c0_23] : memref<32x1xf32, #tpu.memory_space<vmem>>, vector<32x1xf32>
    %41 = vector.broadcast %40 : vector<32x1xf32> to vector<32x128xf32>
    %42 = arith.addf %39, %41 : vector<32x128xf32>
    %cst_24 = arith.constant 0.000000e+00 : f32
    %43 = vector.broadcast %cst_24 : f32 to vector<32x128xf32>
    %44 = arith.maximumf %42, %43 : vector<32x128xf32>
    %c0_25 = arith.constant 0 : index
    %c0_26 = arith.constant 0 : index
    %45 = vector.load %arg8[%c0_25, %c0_26] : memref<32x1xf32, #tpu.memory_space<vmem>>, vector<32x1xf32>
    %46 = vector.broadcast %45 : vector<32x1xf32> to vector<32x128xf32>
    %47 = arith.mulf %44, %46 : vector<32x128xf32>
    %cst_27 = arith.constant dense<0.000000e+00> : vector<128xf32>
    %48 = vector.multi_reduction <add>, %47, %cst_27 [0] : vector<32x128xf32> to vector<128xf32>
    %49 = vector.shape_cast %48 : vector<128xf32> to vector<1x128xf32>
    %c0_28 = arith.constant 0 : index
    %c0_29 = arith.constant 0 : index
    %50 = vector.load %arg9[%c0_28, %c0_29] : memref<1x1xf32, #tpu.memory_space<vmem>>, vector<1x1xf32>
    %51 = vector.broadcast %50 : vector<1x1xf32> to vector<1x128xf32>
    %52 = arith.addf %49, %51 : vector<1x128xf32>
    %53 = arith.negf %52 : vector<1x128xf32>
    %54 = math.exp %53 : vector<1x128xf32>
    %cst_30 = arith.constant 1.000000e+00 : f32
    %55 = vector.broadcast %cst_30 : f32 to vector<1x128xf32>
    %56 = arith.addf %55, %54 : vector<1x128xf32>
    %57 = arith.divf %55, %56 : vector<1x128xf32>
    %c0_31 = arith.constant 0 : index
    %c0_32 = arith.constant 0 : index
    %58 = vector.load %arg10[%c0_31, %c0_32] : memref<1x128xf32, #tpu.memory_space<vmem>>, vector<1x128xf32>
    tpu.vector_store %arg10[%c0_31, %c0_32], %57 {strides = array<i32>} : memref<1x128xf32, #tpu.memory_space<vmem>>, vector<1x128xf32>,
    return
  }
  func.func @transform_0(%arg0: i32) -> (i32, i32) {
    %c0_i32 = arith.constant 0 : i32
    %c0_i32_0 = arith.constant 0 : i32
    return %c0_i32, %arg0 : i32, i32
  }
  func.func @transform_1(%arg0: i32) -> (i32, i32) {
    %c0_i32 = arith.constant 0 : i32
    %c0_i32_0 = arith.constant 0 : i32
    %c0_i32_1 = arith.constant 0 : i32
    return %c0_i32, %c0_i32_0 : i32, i32
  }
  func.func @transform_2(%arg0: i32) -> (i32, i32) {
    %c0_i32 = arith.constant 0 : i32
    %c0_i32_0 = arith.constant 0 : i32
    %c0_i32_1 = arith.constant 0 : i32
    return %c0_i32, %c0_i32_0 : i32, i32
  }
  func.func @transform_3(%arg0: i32) -> (i32, i32) {
    %c0_i32 = arith.constant 0 : i32
    %c0_i32_0 = arith.constant 0 : i32
    %c0_i32_1 = arith.constant 0 : i32
    return %c0_i32, %c0_i32_0 : i32, i32
  }
  func.func @transform_4(%arg0: i32) -> (i32, i32) {
    %c0_i32 = arith.constant 0 : i32
    %c0_i32_0 = arith.constant 0 : i32
    %c0_i32_1 = arith.constant 0 : i32
    return %c0_i32, %c0_i32_0 : i32, i32
  }
  func.func @transform_5(%arg0: i32) -> (i32, i32) {
    %c0_i32 = arith.constant 0 : i32
    %c0_i32_0 = arith.constant 0 : i32
    %c0_i32_1 = arith.constant 0 : i32
    return %c0_i32, %c0_i32_0 : i32, i32
  }
  func.func @transform_6(%arg0: i32) -> (i32, i32) {
    %c0_i32 = arith.constant 0 : i32
    %c0_i32_0 = arith.constant 0 : i32
    %c0_i32_1 = arith.constant 0 : i32
    return %c0_i32, %c0_i32_0 : i32, i32
  }
  func.func @transform_7(%arg0: i32) -> (i32, i32) {
    %c0_i32 = arith.constant 0 : i32
    %c0_i32_0 = arith.constant 0 : i32
    %c0_i32_1 = arith.constant 0 : i32
    return %c0_i32, %c0_i32_0 : i32, i32
  }
  func.func @transform_8(%arg0: i32) -> (i32, i32) {
    %c0_i32 = arith.constant 0 : i32
    %c0_i32_0 = arith.constant 0 : i32
    %c0_i32_1 = arith.constant 0 : i32
    return %c0_i32, %c0_i32_0 : i32, i32
  }
  func.func @transform_9(%arg0: i32) -> (i32, i32) {
    %c0_i32 = arith.constant 0 : i32
    %c0_i32_0 = arith.constant 0 : i32
    return %c0_i32, %arg0 : i32, i32
  }
}

</mosaic_0001>

<llo_original>
// kernel: tpu_custom_call.1
$region0: #{tpu_custom_call.1}
  #allocation0 [shape = 'u32[]', space=smem, size = 0x4, offset = 0x4, fixed_abs, tag = 'smem constant byte address 0x4 - core index']
  #allocation1 [shape = 'u32[144,128]{1,0:T(1,128)}', space=vmem, size = 0x12000, scoped, tag = 'internal scratch']
  #allocation2 [shape = 'f32[1,1]{1,0:T(1,128)S(1)}', space=vmem, size = 0x200, scoped, tag = 'scoped memory for tpu_custom_call.1']
  %s0 = inlined_call_operand.vmem [shape: f32[3,128], index: 0, kind: input, shape index: {}]
  %s1 = inlined_call_operand.vmem [shape: f32[128,3], index: 1, kind: input, shape index: {}]
  %s2 = inlined_call_operand.vmem [shape: f32[128,1], index: 2, kind: input, shape index: {}]
  %s3 = inlined_call_operand.vmem [shape: bf16[64,128], index: 3, kind: input, shape index: {}]
  %s4 = inlined_call_operand.vmem [shape: f32[64,1], index: 4, kind: input, shape index: {}]
  %s5 = inlined_call_operand.vmem [shape: bf16[32,64], index: 5, kind: input, shape index: {}]
  %s6 = inlined_call_operand.vmem [shape: f32[32,1], index: 6, kind: input, shape index: {}]
  %s7 = inlined_call_operand.vmem [shape: f32[32,1], index: 7, kind: input, shape index: {}]
  %s8 = inlined_call_operand.<no memory space> [shape: f32[1,1], index: 8, kind: input, shape index: {}]
  %s9 = inlined_call_operand.hbm [shape: f32[1,128], index: 9, kind: output, shape index: {}]
  %s10 = sld [smem:[#allocation0]]
  $region46: #{tpu_custom_call.1} parent=0
    _
  %s12 = ssub.s32 1, %s10
  %s13 = scalar_select 0, %s12, %s10
  %v14 = vstv %s8
  %15 = vst [vmem:[#allocation2] sm:$0x1] %v14
  $region1: #{tpu_custom_call.1} parent=0
    #allocation3 [shape = 'u8[512]{0}', space=vmem, size = 0x400, scoped, tag = 'output window, operand 0, single buffered']
    #allocation4 [shape = 's32[1]{0}', space=sflag, size = 0x4, scoped, tag = 'scoped memory for tpu_custom_call.1']
    %16 = vsyncpa [#allocation4], 0
    // Predicated region
    $region2: #{tpu_custom_call.1} parent=1 // pred_check
      _
    $region3: #{tpu_custom_call.1} parent=1 // pred_check_branch
      %18 = sbr.rel (0) target = $region5
    $region4: #{tpu_custom_call.1} parent=1 // pred_region
      _
    $region5: #{tpu_custom_call.1} parent=1 // pred_fallthru
      _
    // Predicated region
    $region6: #{tpu_custom_call.1} parent=1 // pred_check
      _
    $region7: #{tpu_custom_call.1} parent=1 // pred_check_branch
      %20 = sbr.rel (0) target = $region9
    $region8: #{tpu_custom_call.1} parent=1 // pred_region
      _
    $region9: #{tpu_custom_call.1} parent=1 // pred_fallthru
      _
    // Predicated region
    $region10: #{tpu_custom_call.1} parent=1 // pred_check
      _
    $region11: #{tpu_custom_call.1} parent=1 // pred_check_branch
      %22 = sbr.rel (0) target = $region13
    $region12: #{tpu_custom_call.1} parent=1 // pred_region
      _
    $region13: #{tpu_custom_call.1} parent=1 // pred_fallthru
      _
    // Predicated region
    $region14: #{tpu_custom_call.1} parent=1 // pred_check
      _
    $region15: #{tpu_custom_call.1} parent=1 // pred_check_branch
      %24 = sbr.rel (0) target = $region17
    $region16: #{tpu_custom_call.1} parent=1 // pred_region
      _
    $region17: #{tpu_custom_call.1} parent=1 // pred_fallthru
      _
    // Predicated region
    $region18: #{tpu_custom_call.1} parent=1 // pred_check
      _
    $region19: #{tpu_custom_call.1} parent=1 // pred_check_branch
      %26 = sbr.rel (0) target = $region21
    $region20: #{tpu_custom_call.1} parent=1 // pred_region
      _
    $region21: #{tpu_custom_call.1} parent=1 // pred_fallthru
      _
    // Predicated region
    $region22: #{tpu_custom_call.1} parent=1 // pred_check
      _
    $region23: #{tpu_custom_call.1} parent=1 // pred_check_branch
      %28 = sbr.rel (0) target = $region25
    $region24: #{tpu_custom_call.1} parent=1 // pred_region
      _
    $region25: #{tpu_custom_call.1} parent=1 // pred_fallthru
      _
    // Predicated region
    $region26: #{tpu_custom_call.1} parent=1 // pred_check
      _
    $region27: #{tpu_custom_call.1} parent=1 // pred_check_branch
      %30 = sbr.rel (0) target = $region29
    $region28: #{tpu_custom_call.1} parent=1 // pred_region
      _
    $region29: #{tpu_custom_call.1} parent=1 // pred_fallthru
      _
    // Predicated region
    $region30: #{tpu_custom_call.1} parent=1 // pred_check
      _
    $region31: #{tpu_custom_call.1} parent=1 // pred_check_branch
      %32 = sbr.rel (0) target = $region33
    $region32: #{tpu_custom_call.1} parent=1 // pred_region
      _
    $region33: #{tpu_custom_call.1} parent=1 // pred_fallthru
      _
    // Predicated region
    $region34: #{tpu_custom_call.1} parent=1 // pred_check
      _
    $region35: #{tpu_custom_call.1} parent=1 // pred_check_branch
      %34 = sbr.rel (0) target = $region37
    $region36: #{tpu_custom_call.1} parent=1 // pred_region
      _
    $region37: #{tpu_custom_call.1} parent=1 // pred_fallthru
      _
    %v36 = vld [vmem:[%s0 + $0x2] sm:$0x1]
    %v37 = vsub.f32 %v36, 1.0
    %v38 = vrcp.pop %v37
    %v39 = vld [vmem:[%s0] sm:$0x1]
    %v40 = vmul.f32 %v39, %v38
    %v41 = vld [vmem:[%s0 + $0x1] sm:$0x1]
    %v42 = vmul.f32 %v41, %v38
    %v43 = vmul.f32 %v36, 0.11111111
    %v44 = vld [vmem:[%s1] sm:$0xff]
    %v45 = vld [vmem:[%s1 + $0x8] sm:$0xff]
    %v46 = vld [vmem:[%s1 + $0x10] sm:$0xff]
    %v47 = vld [vmem:[%s1 + $0x18] sm:$0xff]
    %v48 = vld [vmem:[%s1 + $0x20] sm:$0xff]
    %v49 = vld [vmem:[%s1 + $0x28] sm:$0xff]
    %v50 = vld [vmem:[%s1 + $0x30] sm:$0xff]
    %v51 = vld [vmem:[%s1 + $0x38] sm:$0xff]
    %v52 = vld [vmem:[%s1 + $0x40] sm:$0xff]
    %v53 = vld [vmem:[%s1 + $0x48] sm:$0xff]
    %v54 = vld [vmem:[%s1 + $0x50] sm:$0xff]
    %v55 = vld [vmem:[%s1 + $0x58] sm:$0xff]
    %v56 = vld [vmem:[%s1 + $0x60] sm:$0xff]
    %v57 = vld [vmem:[%s1 + $0x68] sm:$0xff]
    %v58 = vld [vmem:[%s1 + $0x70] sm:$0xff]
    %v59 = vld [vmem:[%s1 + $0x78] sm:$0xff]
    %61 = vset.pattern.permute.xlu0 0
    %62 = vperm.xlu0 %61, %v44
    %v63 = vpop.permute.xlu0 %62
    %66 = vset.pattern.permute.xlu0 0
    %67 = vperm.xlu0 %66, %v45
    %v68 = vpop.permute.xlu0 %67
    %71 = vset.pattern.permute.xlu0 0
    %72 = vperm.xlu0 %71, %v46
    %v73 = vpop.permute.xlu0 %72
    %76 = vset.pattern.permute.xlu0 0
    %77 = vperm.xlu0 %76, %v47
    %v78 = vpop.permute.xlu0 %77
    %81 = vset.pattern.permute.xlu0 0
    %82 = vperm.xlu0 %81, %v48
    %v83 = vpop.permute.xlu0 %82
    %86 = vset.pattern.permute.xlu0 0
    %87 = vperm.xlu0 %86, %v49
    %v88 = vpop.permute.xlu0 %87
    %91 = vset.pattern.permute.xlu0 0
    %92 = vperm.xlu0 %91, %v50
    %v93 = vpop.permute.xlu0 %92
    %96 = vset.pattern.permute.xlu0 0
    %97 = vperm.xlu0 %96, %v51
    %v98 = vpop.permute.xlu0 %97
    %101 = vset.pattern.permute.xlu0 0
    %102 = vperm.xlu0 %101, %v52
    %v103 = vpop.permute.xlu0 %102
    %106 = vset.pattern.permute.xlu0 0
    %107 = vperm.xlu0 %106, %v53
    %v108 = vpop.permute.xlu0 %107
    %111 = vset.pattern.permute.xlu0 0
    %112 = vperm.xlu0 %111, %v54
    %v113 = vpop.permute.xlu0 %112
    %116 = vset.pattern.permute.xlu0 0
    %117 = vperm.xlu0 %116, %v55
    %v118 = vpop.permute.xlu0 %117
    %121 = vset.pattern.permute.xlu0 0
    %122 = vperm.xlu0 %121, %v56
    %v123 = vpop.permute.xlu0 %122
    %126 = vset.pattern.permute.xlu0 0
    %127 = vperm.xlu0 %126, %v57
    %v128 = vpop.permute.xlu0 %127
    %131 = vset.pattern.permute.xlu0 0
    %132 = vperm.xlu0 %131, %v58
    %v133 = vpop.permute.xlu0 %132
    %136 = vset.pattern.permute.xlu0 0
    %137 = vperm.xlu0 %136, %v59
    %v138 = vpop.permute.xlu0 %137
    %v140 = vlaneseq
    %v141 = vshrl.u32 %v140, 7
    %v142 = vsub.s32 0, %v141
    %v143 = vrot.slane %v40, %v142
    %v144 = vmul.f32 %v63, %v143
    %v145 = vmul.f32 %v68, %v143
    %v146 = vmul.f32 %v73, %v143
    %v147 = vmul.f32 %v78, %v143
    %v148 = vmul.f32 %v83, %v143
    %v149 = vmul.f32 %v88, %v143
    %v150 = vmul.f32 %v93, %v143
    %v151 = vmul.f32 %v98, %v143
    %v152 = vmul.f32 %v103, %v143
    %v153 = vmul.f32 %v108, %v143
    %v154 = vmul.f32 %v113, %v143
    %v155 = vmul.f32 %v118, %v143
    %v156 = vmul.f32 %v123, %v143
    %v157 = vmul.f32 %v128, %v143
    %v158 = vmul.f32 %v133, %v143
    %v159 = vmul.f32 %v138, %v143
    %160 = vset.pattern.permute.xlu0 1
    %161 = vperm.xlu0 %160, %v44
    %v162 = vpop.permute.xlu0 %161
    %164 = vset.pattern.permute.xlu0 1
    %165 = vperm.xlu0 %164, %v45
    %v166 = vpop.permute.xlu0 %165
    %168 = vset.pattern.permute.xlu0 1
    %169 = vperm.xlu0 %168, %v46
    %v170 = vpop.permute.xlu0 %169
    %172 = vset.pattern.permute.xlu0 1
    %173 = vperm.xlu0 %172, %v47
    %v174 = vpop.permute.xlu0 %173
    %176 = vset.pattern.permute.xlu0 1
    %177 = vperm.xlu0 %176, %v48
    %v178 = vpop.permute.xlu0 %177
    %180 = vset.pattern.permute.xlu0 1
    %181 = vperm.xlu0 %180, %v49
    %v182 = vpop.permute.xlu0 %181
    %184 = vset.pattern.permute.xlu0 1
    %185 = vperm.xlu0 %184, %v50
    %v186 = vpop.permute.xlu0 %185
    %188 = vset.pattern.permute.xlu0 1
    %189 = vperm.xlu0 %188, %v51
    %v190 = vpop.permute.xlu0 %189
    %192 = vset.pattern.permute.xlu0 1
    %193 = vperm.xlu0 %192, %v52
    %v194 = vpop.permute.xlu0 %193
    %196 = vset.pattern.permute.xlu0 1
    %197 = vperm.xlu0 %196, %v53
    %v198 = vpop.permute.xlu0 %197
    %200 = vset.pattern.permute.xlu0 1
    %201 = vperm.xlu0 %200, %v54
    %v202 = vpop.permute.xlu0 %201
    %204 = vset.pattern.permute.xlu0 1
    %205 = vperm.xlu0 %204, %v55
    %v206 = vpop.permute.xlu0 %205
    %208 = vset.pattern.permute.xlu0 1
    %209 = vperm.xlu0 %208, %v56
    %v210 = vpop.permute.xlu0 %209
    %212 = vset.pattern.permute.xlu0 1
    %213 = vperm.xlu0 %212, %v57
    %v214 = vpop.permute.xlu0 %213
    %216 = vset.pattern.permute.xlu0 1
    %217 = vperm.xlu0 %216, %v58
    %v218 = vpop.permute.xlu0 %217
    %220 = vset.pattern.permute.xlu0 1
    %221 = vperm.xlu0 %220, %v59
    %v222 = vpop.permute.xlu0 %221
    %v224 = vlaneseq
    %v225 = vshrl.u32 %v224, 7
    %v226 = vsub.s32 0, %v225
    %v227 = vrot.slane %v42, %v226
    %v228 = vmul.f32 %v162, %v227
    %v229 = vmul.f32 %v166, %v227
    %v230 = vmul.f32 %v170, %v227
    %v231 = vmul.f32 %v174, %v227
    %v232 = vmul.f32 %v178, %v227
    %v233 = vmul.f32 %v182, %v227
    %v234 = vmul.f32 %v186, %v227
    %v235 = vmul.f32 %v190, %v227
    %v236 = vmul.f32 %v194, %v227
    %v237 = vmul.f32 %v198, %v227
    %v238 = vmul.f32 %v202, %v227
    %v239 = vmul.f32 %v206, %v227
    %v240 = vmul.f32 %v210, %v227
    %v241 = vmul.f32 %v214, %v227
    %v242 = vmul.f32 %v218, %v227
    %v243 = vmul.f32 %v222, %v227
    %v244 = vadd.f32 %v144, %v228
    %v245 = vadd.f32 %v145, %v229
    %v246 = vadd.f32 %v146, %v230
    %v247 = vadd.f32 %v147, %v231
    %v248 = vadd.f32 %v148, %v232
    %v249 = vadd.f32 %v149, %v233
    %v250 = vadd.f32 %v150, %v234
    %v251 = vadd.f32 %v151, %v235
    %v252 = vadd.f32 %v152, %v236
    %v253 = vadd.f32 %v153, %v237
    %v254 = vadd.f32 %v154, %v238
    %v255 = vadd.f32 %v155, %v239
    %v256 = vadd.f32 %v156, %v240
    %v257 = vadd.f32 %v157, %v241
    %v258 = vadd.f32 %v158, %v242
    %v259 = vadd.f32 %v159, %v243
    %260 = vset.pattern.permute.xlu0 2
    %261 = vperm.xlu0 %260, %v44
    %v262 = vpop.permute.xlu0 %261
    %264 = vset.pattern.permute.xlu0 2
    %265 = vperm.xlu0 %264, %v45
    %v266 = vpop.permute.xlu0 %265
    %268 = vset.pattern.permute.xlu0 2
    %269 = vperm.xlu0 %268, %v46
    %v270 = vpop.permute.xlu0 %269
    %272 = vset.pattern.permute.xlu0 2
    %273 = vperm.xlu0 %272, %v47
    %v274 = vpop.permute.xlu0 %273
    %276 = vset.pattern.permute.xlu0 2
    %277 = vperm.xlu0 %276, %v48
    %v278 = vpop.permute.xlu0 %277
    %280 = vset.pattern.permute.xlu0 2
    %281 = vperm.xlu0 %280, %v49
    %v282 = vpop.permute.xlu0 %281
    %284 = vset.pattern.permute.xlu0 2
    %285 = vperm.xlu0 %284, %v50
    %v286 = vpop.permute.xlu0 %285
    %288 = vset.pattern.permute.xlu0 2
    %289 = vperm.xlu0 %288, %v51
    %v290 = vpop.permute.xlu0 %289
    %292 = vset.pattern.permute.xlu0 2
    %293 = vperm.xlu0 %292, %v52
    %v294 = vpop.permute.xlu0 %293
    %296 = vset.pattern.permute.xlu0 2
    %297 = vperm.xlu0 %296, %v53
    %v298 = vpop.permute.xlu0 %297
    %300 = vset.pattern.permute.xlu0 2
    %301 = vperm.xlu0 %300, %v54
    %v302 = vpop.permute.xlu0 %301
    %304 = vset.pattern.permute.xlu0 2
    %305 = vperm.xlu0 %304, %v55
    %v306 = vpop.permute.xlu0 %305
    %308 = vset.pattern.permute.xlu0 2
    %309 = vperm.xlu0 %308, %v56
    %v310 = vpop.permute.xlu0 %309
    %312 = vset.pattern.permute.xlu0 2
    %313 = vperm.xlu0 %312, %v57
    %v314 = vpop.permute.xlu0 %313
    %316 = vset.pattern.permute.xlu0 2
    %317 = vperm.xlu0 %316, %v58
    %v318 = vpop.permute.xlu0 %317
    %320 = vset.pattern.permute.xlu0 2
    %321 = vperm.xlu0 %320, %v59
    %v322 = vpop.permute.xlu0 %321
    %v324 = vlaneseq
    %v325 = vshrl.u32 %v324, 7
    %v326 = vsub.s32 0, %v325
    %v327 = vrot.slane %v43, %v326
    %v328 = vmul.f32 %v262, %v327
    %v329 = vmul.f32 %v266, %v327
    %v330 = vmul.f32 %v270, %v327
    %v331 = vmul.f32 %v274, %v327
    %v332 = vmul.f32 %v278, %v327
    %v333 = vmul.f32 %v282, %v327
    %v334 = vmul.f32 %v286, %v327
    %v335 = vmul.f32 %v290, %v327
    %v336 = vmul.f32 %v294, %v327
    %v337 = vmul.f32 %v298, %v327
    %v338 = vmul.f32 %v302, %v327
    %v339 = vmul.f32 %v306, %v327
    %v340 = vmul.f32 %v310, %v327
    %v341 = vmul.f32 %v314, %v327
    %v342 = vmul.f32 %v318, %v327
    %v343 = vmul.f32 %v322, %v327
    %v344 = vadd.f32 %v244, %v328
    %v345 = vadd.f32 %v245, %v329
    %v346 = vadd.f32 %v246, %v330
    %v347 = vadd.f32 %v247, %v331
    %v348 = vadd.f32 %v248, %v332
    %v349 = vadd.f32 %v249, %v333
    %v350 = vadd.f32 %v250, %v334
    %v351 = vadd.f32 %v251, %v335
    %v352 = vadd.f32 %v252, %v336
    %v353 = vadd.f32 %v253, %v337
    %v354 = vadd.f32 %v254, %v338
    %v355 = vadd.f32 %v255, %v339
    %v356 = vadd.f32 %v256, %v340
    %v357 = vadd.f32 %v257, %v341
    %v358 = vadd.f32 %v258, %v342
    %v359 = vadd.f32 %v259, %v343
    %v360 = vld [vmem:[%s2] sm:$0xff]
    %v361 = vld [vmem:[%s2 + $0x8] sm:$0xff]
    %v362 = vld [vmem:[%s2 + $0x10] sm:$0xff]
    %v363 = vld [vmem:[%s2 + $0x18] sm:$0xff]
    %v364 = vld [vmem:[%s2 + $0x20] sm:$0xff]
    %v365 = vld [vmem:[%s2 + $0x28] sm:$0xff]
    %v366 = vld [vmem:[%s2 + $0x30] sm:$0xff]
    %v367 = vld [vmem:[%s2 + $0x38] sm:$0xff]
    %v368 = vld [vmem:[%s2 + $0x40] sm:$0xff]
    %v369 = vld [vmem:[%s2 + $0x48] sm:$0xff]
    %v370 = vld [vmem:[%s2 + $0x50] sm:$0xff]
    %v371 = vld [vmem:[%s2 + $0x58] sm:$0xff]
    %v372 = vld [vmem:[%s2 + $0x60] sm:$0xff]
    %v373 = vld [vmem:[%s2 + $0x68] sm:$0xff]
    %v374 = vld [vmem:[%s2 + $0x70] sm:$0xff]
    %v375 = vld [vmem:[%s2 + $0x78] sm:$0xff]
    %377 = vset.pattern.permute.xlu0 0
    %378 = vperm.xlu0 %377, %v360
    %v379 = vpop.permute.xlu0 %378
    %382 = vset.pattern.permute.xlu0 0
    %383 = vperm.xlu0 %382, %v361
    %v384 = vpop.permute.xlu0 %383
    %387 = vset.pattern.permute.xlu0 0
    %388 = vperm.xlu0 %387, %v362
    %v389 = vpop.permute.xlu0 %388
    %392 = vset.pattern.permute.xlu0 0
    %393 = vperm.xlu0 %392, %v363
    %v394 = vpop.permute.xlu0 %393
    %397 = vset.pattern.permute.xlu0 0
    %398 = vperm.xlu0 %397, %v364
    %v399 = vpop.permute.xlu0 %398
    %402 = vset.pattern.permute.xlu0 0
    %403 = vperm.xlu0 %402, %v365
    %v404 = vpop.permute.xlu0 %403
    %407 = vset.pattern.permute.xlu0 0
    %408 = vperm.xlu0 %407, %v366
    %v409 = vpop.permute.xlu0 %408
    %412 = vset.pattern.permute.xlu0 0
    %413 = vperm.xlu0 %412, %v367
    %v414 = vpop.permute.xlu0 %413
    %417 = vset.pattern.permute.xlu0 0
    %418 = vperm.xlu0 %417, %v368
    %v419 = vpop.permute.xlu0 %418
    %422 = vset.pattern.permute.xlu0 0
    %423 = vperm.xlu0 %422, %v369
    %v424 = vpop.permute.xlu0 %423
    %427 = vset.pattern.permute.xlu0 0
    %428 = vperm.xlu0 %427, %v370
    %v429 = vpop.permute.xlu0 %428
    %432 = vset.pattern.permute.xlu0 0
    %433 = vperm.xlu0 %432, %v371
    %v434 = vpop.permute.xlu0 %433
    %437 = vset.pattern.permute.xlu0 0
    %438 = vperm.xlu0 %437, %v372
    %v439 = vpop.permute.xlu0 %438
    %442 = vset.pattern.permute.xlu0 0
    %443 = vperm.xlu0 %442, %v373
    %v444 = vpop.permute.xlu0 %443
    %447 = vset.pattern.permute.xlu0 0
    %448 = vperm.xlu0 %447, %v374
    %v449 = vpop.permute.xlu0 %448
    %452 = vset.pattern.permute.xlu0 0
    %453 = vperm.xlu0 %452, %v375
    %v454 = vpop.permute.xlu0 %453
    %v456 = vadd.f32 %v344, %v379
    %v457 = vadd.f32 %v345, %v384
    %v458 = vadd.f32 %v346, %v389
    %v459 = vadd.f32 %v347, %v394
    %v460 = vadd.f32 %v348, %v399
    %v461 = vadd.f32 %v349, %v404
    %v462 = vadd.f32 %v350, %v409
    %v463 = vadd.f32 %v351, %v414
    %v464 = vadd.f32 %v352, %v419
    %v465 = vadd.f32 %v353, %v424
    %v466 = vadd.f32 %v354, %v429
    %v467 = vadd.f32 %v355, %v434
    %v468 = vadd.f32 %v356, %v439
    %v469 = vadd.f32 %v357, %v444
    %v470 = vadd.f32 %v358, %v449
    %v471 = vadd.f32 %v359, %v454
    %v472 = vmax.f32 %v456, 0.0
    %v473 = vmax.f32 %v457, 0.0
    %v474 = vmax.f32 %v458, 0.0
    %v475 = vmax.f32 %v459, 0.0
    %v476 = vmax.f32 %v460, 0.0
    %v477 = vmax.f32 %v461, 0.0
    %v478 = vmax.f32 %v462, 0.0
    %v479 = vmax.f32 %v463, 0.0
    %v480 = vmax.f32 %v464, 0.0
    %v481 = vmax.f32 %v465, 0.0
    %v482 = vmax.f32 %v466, 0.0
    %v483 = vmax.f32 %v467, 0.0
    %v484 = vmax.f32 %v468, 0.0
    %v485 = vmax.f32 %v469, 0.0
    %v486 = vmax.f32 %v470, 0.0
    %v487 = vmax.f32 %v471, 0.0
    %v488 = vld [vmem:[%s3] sm:$0xf]
    %v489 = vld [vmem:[%s3 + $0x4] sm:$0xf]
    %v490 = vld [vmem:[%s3 + $0x8] sm:$0xf]
    %v491 = vld [vmem:[%s3 + $0xc] sm:$0xf]
    %v492 = vld [vmem:[%s3 + $0x10] sm:$0xf]
    %v493 = vld [vmem:[%s3 + $0x14] sm:$0xf]
    %v494 = vld [vmem:[%s3 + $0x18] sm:$0xf]
    %v495 = vld [vmem:[%s3 + $0x1c] sm:$0xf]
    %v496 = vpack.c.bf16 %v473, %v472
    %v497 = vpack.c.bf16 %v475, %v474
    %v498 = vpack.c.bf16 %v477, %v476
    %v499 = vpack.c.bf16 %v479, %v478
    %v500 = vpack.c.bf16 %v481, %v480
    %v501 = vpack.c.bf16 %v483, %v482
    %v502 = vpack.c.bf16 %v485, %v484
    %v503 = vpack.c.bf16 %v487, %v486
    %v504 = vld [vmem:[%s4] sm:$0xff]
    %v505 = vld [vmem:[%s4 + $0x8] sm:$0xff]
    %v506 = vld [vmem:[%s4 + $0x10] sm:$0xff]
    %v507 = vld [vmem:[%s4 + $0x18] sm:$0xff]
    %v508 = vld [vmem:[%s4 + $0x20] sm:$0xff]
    %v509 = vld [vmem:[%s4 + $0x28] sm:$0xff]
    %v510 = vld [vmem:[%s4 + $0x30] sm:$0xff]
    %v511 = vld [vmem:[%s4 + $0x38] sm:$0xff]
    %513 = vset.pattern.permute.xlu0 0
    %514 = vperm.xlu0 %513, %v504
    %v515 = vpop.permute.xlu0 %514
    %518 = vset.pattern.permute.xlu0 0
    %519 = vperm.xlu0 %518, %v505
    %v520 = vpop.permute.xlu0 %519
    %523 = vset.pattern.permute.xlu0 0
    %524 = vperm.xlu0 %523, %v506
    %v525 = vpop.permute.xlu0 %524
    %528 = vset.pattern.permute.xlu0 0
    %529 = vperm.xlu0 %528, %v507
    %v530 = vpop.permute.xlu0 %529
    %533 = vset.pattern.permute.xlu0 0
    %534 = vperm.xlu0 %533, %v508
    %v535 = vpop.permute.xlu0 %534
    %538 = vset.pattern.permute.xlu0 0
    %539 = vperm.xlu0 %538, %v509
    %v540 = vpop.permute.xlu0 %539
    %543 = vset.pattern.permute.xlu0 0
    %544 = vperm.xlu0 %543, %v510
    %v545 = vpop.permute.xlu0 %544
    %548 = vset.pattern.permute.xlu0 0
    %549 = vperm.xlu0 %548, %v511
    %v550 = vpop.permute.xlu0 %549
    %v560 = vunpack.c.l.b16 %v488
    %v561 = vunpack.c.l.b16 %v489
    %v562 = vunpack.c.l.b16 %v490
    %v563 = vunpack.c.l.b16 %v491
    %v564 = vunpack.c.l.b16 %v492
    %v565 = vunpack.c.l.b16 %v493
    %v566 = vunpack.c.l.b16 %v494
    %v567 = vunpack.c.l.b16 %v495
    %v568 = vpack.c.b16 %v561, %v560
    %v569 = vpack.c.b16 %v563, %v562
    %v570 = vpack.c.b16 %v565, %v564
    %v571 = vpack.c.b16 %v567, %v566
    %576 = vmatprep.subr.bf16.mxu0 0
    %577 = vmatpush1.bf16.msra.mxu0 %v496
    %578 = vmatprep.subr.bf16.mxu0 0
    %579 = vmatpush1.bf16.msra.mxu0 %v497
    %580 = vmatprep.subr.bf16.mxu0 0
    %581 = vmatpush1.bf16.msra.mxu0 %v498
    %582 = vmatprep.subr.bf16.mxu0 0
    %583 = vmatpush1.bf16.msra.mxu0 %v499
    %584 = vmatprep.subr.bf16.mxu0 0
    %585 = vmatpush1.bf16.msra.mxu0 %v500
    %586 = vmatprep.subr.bf16.mxu0 0
    %587 = vmatpush1.bf16.msra.mxu0 %v501
    %588 = vmatprep.subr.bf16.mxu0 0
    %589 = vmatpush1.bf16.msra.mxu0 %v502
    %590 = vmatprep.subr.bf16.mxu0 0
    %591 = vmatpush1.bf16.msra.mxu0 %v503
    %592 = vmatprep.subr.bf16.mxu0 0
    %593 = vmatpush1.bf16.msra.mxu0 0
    %594 = vmatprep.subr.bf16.mxu0 0
    %595 = vmatpush1.bf16.msra.mxu0 0
    %596 = vmatprep.subr.bf16.mxu0 0
    %597 = vmatpush1.bf16.msra.mxu0 0
    %598 = vmatprep.subr.bf16.mxu0 0
    %599 = vmatpush1.bf16.msra.mxu0 0
    %600 = vmatprep.subr.bf16.mxu0 0
    %601 = vmatpush1.bf16.msra.mxu0 0
    %602 = vmatprep.subr.bf16.mxu0 0
    %603 = vmatpush1.bf16.msra.mxu0 0
    %604 = vmatprep.subr.bf16.mxu0 0
    %605 = vmatpush1.bf16.msra.mxu0 0
    %606 = vmatprep.subr.bf16.mxu0 0
    %607 = vmatpush1.bf16.msra.mxu0 0
    %608 = vmatprep.mubr.bf16.mxu0 0
    %609 = vmatmul.mubr.bf16.gmra.mrb[0].mxu0 %v568
    %v610 = vpop.f32.mrb[0].mxu0
    %v611 = vadd.f32 %v515, %v610
    %v612 = vpop.f32.mrb[0].mxu0
    %v613 = vpop.f32.mrb[0].mxu0
    %v614 = vadd.f32 %v520, %v613
    %v615 = vpop.f32.mrb[0].mxu0
    %616 = vmatprep.mubr.bf16.mxu0 0
    %617 = vmatmul.mubr.bf16.gmra.mrb[0].mxu0 %v569
    %v618 = vpop.f32.mrb[0].mxu0
    %v619 = vadd.f32 %v525, %v618
    %v620 = vpop.f32.mrb[0].mxu0
    %v621 = vpop.f32.mrb[0].mxu0
    %v622 = vadd.f32 %v530, %v621
    %v623 = vpop.f32.mrb[0].mxu0
    %624 = vmatprep.mubr.bf16.mxu0 0
    %625 = vmatmul.mubr.bf16.gmra.mrb[0].mxu0 %v570
    %v626 = vpop.f32.mrb[0].mxu0
    %v627 = vadd.f32 %v535, %v626
    %v628 = vpop.f32.mrb[0].mxu0
    %v629 = vpop.f32.mrb[0].mxu0
    %v630 = vadd.f32 %v540, %v629
    %v631 = vpop.f32.mrb[0].mxu0
    %632 = vmatprep.mubr.bf16.mxu0 0
    %633 = vmatmul.mubr.bf16.gmra.mrb[0].mxu0 %v571
    %v634 = vpop.f32.mrb[0].mxu0
    %v635 = vadd.f32 %v545, %v634
    %v636 = vpop.f32.mrb[0].mxu0
    %v637 = vpop.f32.mrb[0].mxu0
    %v638 = vadd.f32 %v550, %v637
    %v639 = vpop.f32.mrb[0].mxu0
    %640 = vdwg.mxu0
    %v641 = vmax.f32 %v611, 0.0
    %v642 = vmax.f32 %v614, 0.0
    %v643 = vmax.f32 %v619, 0.0
    %v644 = vmax.f32 %v622, 0.0
    %v645 = vmax.f32 %v627, 0.0
    %v646 = vmax.f32 %v630, 0.0
    %v647 = vmax.f32 %v635, 0.0
    %v648 = vmax.f32 %v638, 0.0
    %v649 = vld [vmem:[%s5] sm:$0xf]
    %v650 = vld [vmem:[%s5 + $0x4] sm:$0xf]
    %v651 = vld [vmem:[%s5 + $0x8] sm:$0xf]
    %v652 = vld [vmem:[%s5 + $0xc] sm:$0xf]
    %v653 = vpack.c.bf16 %v642, %v641
    %v654 = vpack.c.bf16 %v644, %v643
    %v655 = vpack.c.bf16 %v646, %v645
    %v656 = vpack.c.bf16 %v648, %v647
    %v657 = vld [vmem:[%s6] sm:$0xff]
    %v658 = vld [vmem:[%s6 + $0x8] sm:$0xff]
    %v659 = vld [vmem:[%s6 + $0x10] sm:$0xff]
    %v660 = vld [vmem:[%s6 + $0x18] sm:$0xff]
    %662 = vset.pattern.permute.xlu0 0
    %663 = vperm.xlu0 %662, %v657
    %v664 = vpop.permute.xlu0 %663
    %667 = vset.pattern.permute.xlu0 0
    %668 = vperm.xlu0 %667, %v658
    %v669 = vpop.permute.xlu0 %668
    %672 = vset.pattern.permute.xlu0 0
    %673 = vperm.xlu0 %672, %v659
    %v674 = vpop.permute.xlu0 %673
    %677 = vset.pattern.permute.xlu0 0
    %678 = vperm.xlu0 %677, %v660
    %v679 = vpop.permute.xlu0 %678
    %v685 = vunpack.c.l.b16 %v649
    %v686 = vunpack.c.l.b16 %v650
    %v687 = vunpack.c.l.b16 %v651
    %v688 = vunpack.c.l.b16 %v652
    %v689 = vpack.c.b16 %v686, %v685
    %v690 = vpack.c.b16 %v688, %v687
    %vm691 = vcmask 523264
    %v693 = vsel %vm691, %v689, 0
    %v696 = vsel %vm691, %v690, 0
    %698 = vmatprep.subr.bf16.mxu0 0
    %699 = vmatpush1.bf16.msra.mxu0 %v653
    %700 = vmatprep.subr.bf16.mxu0 0
    %701 = vmatpush1.bf16.msra.mxu0 %v654
    %702 = vmatprep.subr.bf16.mxu0 0
    %703 = vmatpush1.bf16.msra.mxu0 %v655
    %704 = vmatprep.subr.bf16.mxu0 0
    %705 = vmatpush1.bf16.msra.mxu0 %v656
    %706 = vmatprep.subr.bf16.mxu0 0
    %707 = vmatpush1.bf16.msra.mxu0 0
    %708 = vmatprep.subr.bf16.mxu0 0
    %709 = vmatpush1.bf16.msra.mxu0 0
    %710 = vmatprep.subr.bf16.mxu0 0
    %711 = vmatpush1.bf16.msra.mxu0 0
    %712 = vmatprep.subr.bf16.mxu0 0
    %713 = vmatpush1.bf16.msra.mxu0 0
    %714 = vmatprep.subr.bf16.mxu0 0
    %715 = vmatpush1.bf16.msra.mxu0 0
    %716 = vmatprep.subr.bf16.mxu0 0
    %717 = vmatpush1.bf16.msra.mxu0 0
    %718 = vmatprep.subr.bf16.mxu0 0
    %719 = vmatpush1.bf16.msra.mxu0 0
    %720 = vmatprep.subr.bf16.mxu0 0
    %721 = vmatpush1.bf16.msra.mxu0 0
    %722 = vmatprep.subr.bf16.mxu0 0
    %723 = vmatpush1.bf16.msra.mxu0 0
    %724 = vmatprep.subr.bf16.mxu0 0
    %725 = vmatpush1.bf16.msra.mxu0 0
    %726 = vmatprep.subr.bf16.mxu0 0
    %727 = vmatpush1.bf16.msra.mxu0 0
    %728 = vmatprep.subr.bf16.mxu0 0
    %729 = vmatpush1.bf16.msra.mxu0 0
    %730 = vmatprep.mubr.bf16.mxu0 0
    %731 = vmatmul.mubr.bf16.gmra.mrb[0].mxu0 %v693
    %v732 = vpop.f32.mrb[0].mxu0
    %v733 = vadd.f32 %v664, %v732
    %v734 = vpop.f32.mrb[0].mxu0
    %v735 = vpop.f32.mrb[0].mxu0
    %v736 = vadd.f32 %v669, %v735
    %v737 = vpop.f32.mrb[0].mxu0
    %738 = vmatprep.mubr.bf16.mxu0 0
    %739 = vmatmul.mubr.bf16.gmra.mrb[0].mxu0 %v696
    %v740 = vpop.f32.mrb[0].mxu0
    %v741 = vadd.f32 %v674, %v740
    %v742 = vpop.f32.mrb[0].mxu0
    %v743 = vpop.f32.mrb[0].mxu0
    %v744 = vadd.f32 %v679, %v743
    %v745 = vpop.f32.mrb[0].mxu0
    %746 = vdwg.mxu0
    %v747 = vmax.f32 %v733, 0.0
    %v748 = vmax.f32 %v736, 0.0
    %v749 = vmax.f32 %v741, 0.0
    %v750 = vmax.f32 %v744, 0.0
    %v751 = vld [vmem:[%s7] sm:$0xff]
    %v752 = vld [vmem:[%s7 + $0x8] sm:$0xff]
    %v753 = vld [vmem:[%s7 + $0x10] sm:$0xff]
    %v754 = vld [vmem:[%s7 + $0x18] sm:$0xff]
    %756 = vset.pattern.permute.xlu0 0
    %757 = vperm.xlu0 %756, %v751
    %v758 = vpop.permute.xlu0 %757
    %761 = vset.pattern.permute.xlu0 0
    %762 = vperm.xlu0 %761, %v752
    %v763 = vpop.permute.xlu0 %762
    %766 = vset.pattern.permute.xlu0 0
    %767 = vperm.xlu0 %766, %v753
    %v768 = vpop.permute.xlu0 %767
    %771 = vset.pattern.permute.xlu0 0
    %772 = vperm.xlu0 %771, %v754
    %v773 = vpop.permute.xlu0 %772
    %v775 = vmul.f32 %v747, %v758
    %v776 = vmul.f32 %v748, %v763
    %v777 = vmul.f32 %v749, %v768
    %v778 = vmul.f32 %v750, %v773
    %v779 = vadd.f32 %v775, %v776
    %v780 = vadd.f32 %v779, %v777
    %v781 = vadd.f32 %v780, %v778
    %v782 = vrot.slane %v781, 4
    %v783 = vadd.f32 %v781, %v782
    %v784 = vrot.slane %v783, 2
    %v785 = vadd.f32 %v783, %v784
    %v786 = vrot.slane %v785, 1
    %v787 = vadd.f32 %v785, %v786
    %v788 = vld [vmem:[#allocation2] sm:$0x1]
    %790 = vset.pattern.permute.xlu0 0
    %791 = vperm.xlu0 %790, %v788
    %v792 = vpop.permute.xlu0 %791
    %v794 = vlaneseq
    %v795 = vshrl.u32 %v794, 7
    %v796 = vsub.s32 0, %v795
    %v797 = vrot.slane %v792, %v796
    %v798 = vadd.f32 %v787, %v797
    %v799 = vxor.u32 %v798, 2147483648
    %v800 = vmul.f32 %v799, 1.442695
    %v801 = vpow.pop %v800
    %v802 = vadd.f32 %v801, 1.0
    %v803 = vrcp.pop %v802
    %v804 = vmul.f32 1.0, %v803
    %805 = vst [vmem:[#allocation3] sm:$0x1] %v804
    // Predicated region
    $region38: #{tpu_custom_call.1} parent=1 // pred_check
      _
    $region39: #{tpu_custom_call.1} parent=1 // pred_check_branch
      %807 = sbr.rel (0) target = $region41
    $region40: #{tpu_custom_call.1} parent=1 // pred_region
      %s809 = ssub.s32 16, 16
      %810 = vsyncadd [#allocation4], %s809
      %s812 = sshll.u32 [#allocation3], 4
      %s813 = int_to_ptr.vmem [resolvable:$true] %s812
      %815 = dma.vmem_to_hbm [thread:$0]  %s813, 16, %s9, [#allocation4]
    $region41: #{tpu_custom_call.1} parent=1 // pred_fallthru
      _
    // Predicated region
    $region42: #{tpu_custom_call.1} parent=1 // pred_check
      _
    $region43: #{tpu_custom_call.1} parent=1 // pred_check_branch
      %817 = sbr.rel (0) target = $region45
    $region44: #{tpu_custom_call.1} parent=1 // pred_region
      %818 = dma.done [#allocation4], 16
    $region45: #{tpu_custom_call.1} parent=1 // pred_fallthru
      _
    %819 = vsyncpa [#allocation4], 1

</llo_original>
